<compile_context>
chip_gen: v5e
topology: v5e:2x2
jax: 0.10.0
libtpu: 0.0.40
codegen_flags: <defaults>
</compile_context>

<pallas_src>
import jax
import jax.numpy as jnp
import numpy as np
from jax.experimental import pallas as pl
from jax.experimental.pallas import tpu as pltpu


_VMEM_LIMIT_BYTES = 48 * 1024 * 1024   # > default scoped (16/32 MiB), < v7x 64 MiB physical


def _pick_tile(hw, max_tile=2048):
    """Largest HW tile <= max_tile that divides HW (multiple of 128 when tiling)."""
    if hw <= max_tile:
        return hw
    t = (max_tile // 128) * 128
    while t >= 128:
        if hw % t == 0:
            return t
        t -= 128
    return hw   # no clean divisor: fall back to whole row (still correct)


# ----------------------------------------------------------------------------
# Parameter folding / packing (plain JAX glue, runs once)
# ----------------------------------------------------------------------------

def _wn_conv1x1(key, cin, cout, scale=0.1):
    # weight_norm(dim=0): w = g * v / ||v|| per output channel; at PyTorch init
    # g == ||v|| so the effective weight equals v.  Fold it here.  For trained
    # checkpoints g must be loaded separately and this formula applied as-is.
    kv, kb = jax.random.split(key)
    v = jax.random.normal(kv, (cout, cin), jnp.float32) * scale
    norm = jnp.sqrt(jnp.sum(v * v, axis=1, keepdims=True))
    g = norm
    w = g * v / norm                          # (cout, cin) effective weight
    b = jax.random.normal(kb, (cout,), jnp.float32) * scale
    return w, b


def init_params(key, C, reduction=16):
    Hc = C // 2
    Cr = max(C // reduction, 1)
    keys = jax.random.split(key, 12)
    p = {}
    p['w_c1'], p['b_c1'] = _wn_conv1x1(keys[0], C, Hc)
    p['w_c2'], p['b_c2'] = _wn_conv1x1(keys[1], C, Hc)
    p['w_f12'], p['b_f12'] = _wn_conv1x1(keys[2], C, Hc)
    p['w_c0'], p['b_c0'] = _wn_conv1x1(keys[3], C, Hc)
    p['w_c3'], p['b_c3'] = _wn_conv1x1(keys[4], C, Hc)
    p['w_f03'], p['b_f03'] = _wn_conv1x1(keys[5], C * 3 // 2, C)
    p['w_m1'], p['b_m1'] = _wn_conv1x1(keys[6], C, Cr)    # HCA conv_mean
    p['w_m2'], p['b_m2'] = _wn_conv1x1(keys[7], Cr, C)
    p['w_x1'], p['b_x1'] = _wn_conv1x1(keys[8], C, Cr)    # HCA conv_max
    p['w_x2'], p['b_x2'] = _wn_conv1x1(keys[9], Cr, C)
    p['w_l1'], p['b_l1'] = _wn_conv1x1(keys[10], C, Cr)   # HCA local
    p['w_l2'], p['b_l2'] = _wn_conv1x1(keys[11], Cr, C)
    return p


def pack_params(p, C):
    """Pack the 24 torch-style tensors into 9 kernel-ready arrays (weights bf16)."""
    Hc = C // 2
    bf16 = jnp.bfloat16
    f32 = jnp.float32

    # Block-diagonal fused branch conv.  Branch output channel order:
    # [conv1 | conv2 | conv0 | conv3]; input channel order: [x1 | x2 | x0 | x3].
    wbd = jnp.zeros((2 * C, 4 * C), f32)
    for i, wk in enumerate(['w_c1', 'w_c2', 'w_c0', 'w_c3']):
        wbd = wbd.at[i * Hc:(i + 1) * Hc, i * C:(i + 1) * C].set(p[wk])
    bcat = jnp.concatenate([p['b_c1'], p['b_c2'], p['b_c0'], p['b_c3']])      # (2C,)

    # fuse12 consumes branch rows [conv1|conv2] = 0:C; pad the rest with zeros
    # so it is a single matmul over the whole (2C, TH) branch tensor.
    wf12p = jnp.concatenate([p['w_f12'], jnp.zeros((Hc, C), f32)], axis=1)    # (Hc, 2C)
    # fuse03 = Wf @ fuse12 + Wb @ branch (conv0/conv3 part, zero-padded).
    wf03f = p['w_f03'][:, 0:Hc]                                               # (C, Hc)
    wf03bp = jnp.concatenate([jnp.zeros((C, C), f32),
                              p['w_f03'][:, Hc:3 * Hc]], axis=1)              # (C, 2C)
    wpa = jnp.concatenate([wf12p, wf03bp], axis=0)                            # (3Hc, 2C)
    bpack = jnp.concatenate([bcat, p['b_f12'], p['b_f03']])[:, None]          # (2C+Hc+C, 1)

    # HCA: pack the three SE branches (mean / max / local).
    w1hca = jnp.concatenate([p['w_m1'], p['w_x1'], p['w_l1']], axis=0)        # (3Cr, C)
    b1hca = jnp.concatenate([p['b_m1'], p['b_x1'], p['b_l1']])[:, None]       # (3Cr, 1)
    w2hca = jnp.concatenate([p['w_m2'], p['w_x2'], p['w_l2']], axis=1)        # (C, 3Cr)
    b2hca = jnp.concatenate([p['b_m2'], p['b_x2'], p['b_l2']])[:, None]       # (3C, 1)

    return dict(
        wbd=wbd.astype(bf16), wpa=wpa.astype(bf16), wf03f=wf03f.astype(bf16),
        bpack=bpack.astype(f32),
        w1hca=w1hca.astype(bf16), b1hca=b1hca.astype(f32),
        w2hca=w2hca.astype(bf16), b2hca=b2hca.astype(f32),
    )


# ----------------------------------------------------------------------------
# Pallas kernels
# ----------------------------------------------------------------------------

def feature_fusion(xs, params, reduction=16, max_tile=2048):
    """xs: list of 4 arrays of shape (B, C, H*W) float32 (NCHW, spatial flat)."""
    x0, x1, x2, x3 = xs
    B, C, HW = x0.shape
    assert C % 2 == 0
    Hc = C // 2
    Cr = max(C // reduction, 1)
    TH = _pick_tile(HW, max_tile)
    assert HW % TH == 0          # exact tiles -> pooling needs no row masking
    T = HW // TH

    pk = pack_params(params, C)
    xcat = jnp.concatenate([x1, x2, x0, x3], axis=1).astype(jnp.bfloat16)  # (B, 4C, HW)

    f32, bf16 = jnp.float32, jnp.bfloat16

    # --------------------- pass 1: fused convs + channel sum/max ------------
    def _fuse_kernel(x_ref, wbd_ref, wpa_ref, wf03f_ref, bpk_ref, y_ref, st_ref):
        t = pl.program_id(1)

        x = x_ref[...]                                   # (4C, TH) bf16
        bpk = bpk_ref[...]                               # (2C+Hc+C, 1) f32
        b_br = bpk[0:2 * C]
        b_f12 = bpk[2 * C:2 * C + Hc]
        b_f03 = bpk[2 * C + Hc:]
        wpa = wpa_ref[...]                               # (3Hc, 2C) bf16
        w_f12p = wpa[0:Hc]                               # (Hc, 2C)
        w_f03bp = wpa[Hc:]                               # (C, 2C)

        # 4 branch 1x1 convs fused into one block-diagonal matmul (K = 4C).
        branch = jax.nn.relu(
            jnp.dot(wbd_ref[...], x, preferred_element_type=f32) + b_br)     # (2C, TH)
        branch_b = branch.astype(bf16)

        # fuse12 over cat([conv1, conv2]) via zero-padded weight.
        fuse12 = jax.nn.relu(
            jnp.dot(w_f12p, branch_b, preferred_element_type=f32) + b_f12)   # (Hc, TH)

        # fuse03 over cat([fuse12, conv0, conv3]) via split + zero-padded weights.
        fuse03 = jax.nn.relu(
            jnp.dot(wf03f_ref[...], fuse12.astype(bf16), preferred_element_type=f32)
            + jnp.dot(w_f03bp, branch_b, preferred_element_type=f32)
            + b_f03)                                                          # (C, TH)

        y_ref[...] = fuse03.astype(y_ref.dtype)

        # Running per-batch channel sum / max (fuse03 >= 0, so 0 is a valid max
        # identity).  st_ref is output-resident across the 'arbitrary' t axis.
        @pl.when(t == 0)
        def _():
            st_ref[...] = jnp.zeros_like(st_ref)

        cur = st_ref[...]                                                     # (C, 2)
        tile_sum = jnp.sum(fuse03, axis=1, keepdims=True)
        tile_max = jnp.max(fuse03, axis=1, keepdims=True)
        st_ref[...] = jnp.concatenate(
            [cur[:, 0:1] + tile_sum, jnp.maximum(cur[:, 1:2], tile_max)], axis=1)

    # --------------------- pass 2: HCA attention -----------------------------
    def _hca_kernel(y_ref, st_ref, w1_ref, b1_ref, w2_ref, b2_ref, o_ref):
        y = y_ref[...]                                   # (C, TH) bf16
        st = st_ref[...]                                 # (C, 2) f32
        mean_v = (st[:, 0:1] * (1.0 / HW)).astype(bf16)  # AdaptiveAvgPool2d(1)
        max_v = st[:, 1:2].astype(bf16)                  # AdaptiveMaxPool2d(1)

        w1 = w1_ref[...]                                 # (3Cr, C) bf16
        b1 = b1_ref[...]                                 # (3Cr, 1) f32
        w2 = w2_ref[...]                                 # (C, 3Cr) bf16
        b2 = b2_ref[...]                                 # (3C, 1) f32

        def pooled_se(vec, wa, ba, wb, bb):              # tiny (N=1) SE branch
            h = jax.nn.relu(jnp.dot(wa, vec, preferred_element_type=f32) + ba)   # (Cr, 1)
            z = jnp.dot(wb, h.astype(bf16), preferred_element_type=f32) + bb     # (C, 1)
            return jax.nn.sigmoid(z)

        up_mean = pooled_se(mean_v, w1[0:Cr], b1[0:Cr],
                            w2[:, 0:Cr], b2[0:C])
        bt_max = pooled_se(max_v, w1[Cr:2 * Cr], b1[Cr:2 * Cr],
                           w2[:, Cr:2 * Cr], b2[C:2 * C])

        # Per-pixel local SE.
        wl1, bl1 = w1[2 * Cr:], b1[2 * Cr:]
        wl2, bl2 = w2[:, 2 * Cr:], b2[2 * C:]
        h = jax.nn.relu(jnp.dot(wl1, y, preferred_element_type=f32) + bl1)       # (Cr, TH)
        if Cr <= 8:
            # Rank-Cr projection as a VPU broadcast outer product (avoids a
            # K=Cr MXU pass).
            z = bl2                                                              # (C, 1)
            for r in range(Cr):
                z = z + wl2[:, r:r + 1].astype(f32) * h[r:r + 1, :]              # (C, TH)
        else:
            z = jnp.dot(wl2, h.astype(bf16), preferred_element_type=f32) + bl2
        down_local = jax.nn.sigmoid(z)                                           # (C, TH)

        weight = up_mean + bt_max + down_local
        o_ref[...] = (y.astype(f32) * weight).astype(o_ref.dtype)

    # --------------------- specs & calls -------------------------------------
    def _tile_spec(nch):
        return pl.BlockSpec((None, nch, TH), lambda b, t: (b, 0, t))

    def _full_spec(a):
        n = a.ndim
        return pl.BlockSpec(a.shape, lambda *_: (0,) * n)

    stats_spec = pl.BlockSpec((None, C, 2), lambda b, t: (b, 0, 0))

    y_bf, stats = pl.pallas_call(
        _fuse_kernel,
        out_shape=(jax.ShapeDtypeStruct((B, C, HW), bf16),
                   jax.ShapeDtypeStruct((B, C, 2), f32)),
        grid=(B, T),
        in_specs=[_tile_spec(4 * C),
                  _full_spec(pk['wbd']), _full_spec(pk['wpa']),
                  _full_spec(pk['wf03f']), _full_spec(pk['bpack'])],
        out_specs=(_tile_spec(C), stats_spec),
        compiler_params=pltpu.CompilerParams(
            dimension_semantics=("parallel", "arbitrary"),
            vmem_limit_bytes=_VMEM_LIMIT_BYTES),
    )(xcat, pk['wbd'], pk['wpa'], pk['wf03f'], pk['bpack'])

    out = pl.pallas_call(
        _hca_kernel,
        out_shape=jax.ShapeDtypeStruct((B, C, HW), f32),
        grid=(B, T),
        in_specs=[_tile_spec(C), stats_spec,
                  _full_spec(pk['w1hca']), _full_spec(pk['b1hca']),
                  _full_spec(pk['w2hca']), _full_spec(pk['b2hca'])],
        out_specs=_tile_spec(C),
        compiler_params=pltpu.CompilerParams(
            dimension_semantics=("parallel", "parallel"),
            vmem_limit_bytes=_VMEM_LIMIT_BYTES),
    )(y_bf, stats, pk['w1hca'], pk['b1hca'], pk['w2hca'], pk['b2hca'])

    return out


# ----------------------------------------------------------------------------
# Plain-JAX f32 reference (same (B, C, HW) layout, unpacked params)
# ----------------------------------------------------------------------------

def reference(xs, p):
    x0, x1, x2, x3 = xs
    relu, sig = jax.nn.relu, jax.nn.sigmoid

    def conv(x, w, b):
        return jnp.einsum('oi,bih->boh', w, x) + b[None, :, None]

    conv1 = relu(conv(x1, p['w_c1'], p['b_c1']))
    conv2 = relu(conv(x2, p['w_c2'], p['b_c2']))
    fuse12 = relu(conv(jnp.concatenate([conv1, conv2], axis=1),
                       p['w_f12'], p['b_f12']))
    conv0 = relu(conv(x0, p['w_c0'], p['b_c0']))
    conv3 = relu(conv(x3, p['w_c3'], p['b_c3']))
    fuse03 = relu(conv(jnp.concatenate([fuse12, conv0, conv3], axis=1),
                       p['w_f03'], p['b_f03']))
    y = fuse03
    y_mean = jnp.mean(y, axis=2, keepdims=True)
    y_max = jnp.max(y, axis=2, keepdims=True)

    def se(z, w1, b1, w2, b2):
        return sig(conv(relu(conv(z, w1, b1)), w2, b2))

    w = (se(y_mean, p['w_m1'], p['b_m1'], p['w_m2'], p['b_m2'])
         + se(y_max, p['w_x1'], p['b_x1'], p['w_x2'], p['b_x2'])
         + se(y, p['w_l1'], p['b_l1'], p['w_l2'], p['b_l2']))
    return y * w


if __name__ == "__main__":
    B, C, H, W = 2, 32, 8, 8        # inChannels=32, reduction=16 -> Cr=2
    HW = H * W
    key = jax.random.PRNGKey(0)
    kx, kp = jax.random.split(key)
    xkeys = jax.random.split(kx, 4)

    # PyTorch NCHW inputs; flattening spatial is a free reshape in this layout.
    xs_nchw = [jax.random.normal(xkeys[i], (B, C, H, W), jnp.float32)
               for i in range(4)]
    xs = [x.reshape(B, C, HW) for x in xs_nchw]

    params = init_params(kp, C, reduction=16)

    out = feature_fusion(xs, params, reduction=16)
    out = jax.block_until_ready(out)

    ref = reference(xs, params)
    np.testing.assert_allclose(np.asarray(out), np.asarray(ref),
                               rtol=2e-2, atol=2e-2)

    # Back to the PyTorch module's NCHW output layout (free reshape).
    out_nchw = out.reshape(B, C, H, W)
    jax.block_until_ready(out_nchw)
    print("KERNEL_OK")
</pallas_src>

<mosaic_0001>
module attributes {stable_mosaic.version = 11 : i64} {
  func.func @_fuse_kernel(%arg0: i32, %arg1: i32, %arg2: memref<1x128x64xbf16, #tpu.memory_space<vmem>>, %arg3: memref<64x128xbf16, #tpu.memory_space<vmem>>, %arg4: memref<48x64xbf16, #tpu.memory_space<vmem>>, %arg5: memref<32x16xbf16, #tpu.memory_space<vmem>>, %arg6: memref<112x1xf32, #tpu.memory_space<vmem>>, %arg7: memref<1x32x64xbf16, #tpu.memory_space<vmem>>, %arg8: memref<1x32x2xf32, #tpu.memory_space<vmem>>) attributes {dimension_semantics = [#tpu.dimension_semantics<parallel>, #tpu.dimension_semantics<arbitrary>], iteration_bounds = array<i64: 2, 1>, scalar_prefetch = 0 : i64, scratch_operands = 0 : i64, tpu.core_type = #tpu.core_type<tc>, window_params = [{transform_indices = @transform_0, window_bounds = array<i64: 1, 128, 64>}, {pipeline_mode = #tpu.pipeline_mode<synchronous>, transform_indices = @transform_1, window_bounds = array<i64: 64, 128>}, {pipeline_mode = #tpu.pipeline_mode<synchronous>, transform_indices = @transform_2, window_bounds = array<i64: 48, 64>}, {pipeline_mode = #tpu.pipeline_mode<synchronous>, transform_indices = @transform_3, window_bounds = array<i64: 32, 16>}, {pipeline_mode = #tpu.pipeline_mode<synchronous>, transform_indices = @transform_4, window_bounds = array<i64: 112, 1>}, {transform_indices = @transform_5, window_bounds = array<i64: 1, 32, 64>}, {transform_indices = @transform_6, window_bounds = array<i64: 1, 32, 2>}]} {
    %c0 = arith.constant 0 : index
    %c0_0 = arith.constant 0 : index
    %c0_1 = arith.constant 0 : index
    %0 = vector.load %arg2[%c0, %c0_0, %c0_1] : memref<1x128x64xbf16, #tpu.memory_space<vmem>>, vector<1x128x64xbf16>
    %1 = vector.shape_cast %0 : vector<1x128x64xbf16> to vector<128x64xbf16>
    %c0_2 = arith.constant 0 : index
    %c0_3 = arith.constant 0 : index
    %2 = vector.load %arg6[%c0_2, %c0_3] : memref<112x1xf32, #tpu.memory_space<vmem>>, vector<112x1xf32>
    %3 = vector.extract_strided_slice %2 {offsets = [0, 0], sizes = [64, 1], strides = [1, 1]} : vector<112x1xf32> to vector<64x1xf32>
    %4 = vector.extract_strided_slice %2 {offsets = [64, 0], sizes = [16, 1], strides = [1, 1]} : vector<112x1xf32> to vector<16x1xf32>
    %5 = vector.extract_strided_slice %2 {offsets = [80, 0], sizes = [32, 1], strides = [1, 1]} : vector<112x1xf32> to vector<32x1xf32>
    %c0_4 = arith.constant 0 : index
    %c0_5 = arith.constant 0 : index
    %6 = vector.load %arg4[%c0_4, %c0_5] : memref<48x64xbf16, #tpu.memory_space<vmem>>, vector<48x64xbf16>
    %7 = vector.extract_strided_slice %6 {offsets = [0, 0], sizes = [16, 64], strides = [1, 1]} : vector<48x64xbf16> to vector<16x64xbf16>
    %8 = vector.extract_strided_slice %6 {offsets = [16, 0], sizes = [32, 64], strides = [1, 1]} : vector<48x64xbf16> to vector<32x64xbf16>
    %c0_6 = arith.constant 0 : index
    %c0_7 = arith.constant 0 : index
    %9 = vector.load %arg3[%c0_6, %c0_7] : memref<64x128xbf16, #tpu.memory_space<vmem>>, vector<64x128xbf16>
    %cst = arith.constant dense<0.000000e+00> : vector<64x64xf32>
    %10 = tpu.matmul %9, %1, %cst {dimension_numbers = #tpu.dot_dimension_numbers<[1], [0], [0], [1], [0, 0, 1, 1], [], []>} : vector<64x128xbf16>, vector<128x64xbf16>, vector<64x64xf32> -> vector<64x64xf32>
    %11 = vector.broadcast %3 : vector<64x1xf32> to vector<64x64xf32>
    %12 = arith.addf %10, %11 : vector<64x64xf32>
    %cst_8 = arith.constant 0.000000e+00 : f32
    %13 = vector.broadcast %cst_8 : f32 to vector<64x64xf32>
    %14 = arith.maximumf %12, %13 : vector<64x64xf32>
    %15 = arith.truncf %14 : vector<64x64xf32> to vector<64x64xbf16>
    %cst_9 = arith.constant dense<0.000000e+00> : vector<16x64xf32>
    %16 = tpu.matmul %7, %15, %cst_9 {dimension_numbers = #tpu.dot_dimension_numbers<[1], [0], [0], [1], [0, 0, 1, 1], [], []>} : vector<16x64xbf16>, vector<64x64xbf16>, vector<16x64xf32> -> vector<16x64xf32>
    %17 = vector.broadcast %4 : vector<16x1xf32> to vector<16x64xf32>
    %18 = arith.addf %16, %17 : vector<16x64xf32>
    %cst_10 = arith.constant 0.000000e+00 : f32
    %19 = vector.broadcast %cst_10 : f32 to vector<16x64xf32>
    %20 = arith.maximumf %18, %19 : vector<16x64xf32>
    %c0_11 = arith.constant 0 : index
    %c0_12 = arith.constant 0 : index
    %21 = vector.load %arg5[%c0_11, %c0_12] : memref<32x16xbf16, #tpu.memory_space<vmem>>, vector<32x16xbf16>
    %22 = arith.truncf %20 : vector<16x64xf32> to vector<16x64xbf16>
    %cst_13 = arith.constant dense<0.000000e+00> : vector<32x64xf32>
    %23 = tpu.matmul %21, %22, %cst_13 {dimension_numbers = #tpu.dot_dimension_numbers<[1], [0], [0], [1], [0, 0, 1, 1], [], []>} : vector<32x16xbf16>, vector<16x64xbf16>, vector<32x64xf32> -> vector<32x64xf32>
    %cst_14 = arith.constant dense<0.000000e+00> : vector<32x64xf32>
    %24 = tpu.matmul %8, %15, %cst_14 {dimension_numbers = #tpu.dot_dimension_numbers<[1], [0], [0], [1], [0, 0, 1, 1], [], []>} : vector<32x64xbf16>, vector<64x64xbf16>, vector<32x64xf32> -> vector<32x64xf32>
    %25 = arith.addf %23, %24 : vector<32x64xf32>
    %26 = vector.broadcast %5 : vector<32x1xf32> to vector<32x64xf32>
    %27 = arith.addf %25, %26 : vector<32x64xf32>
    %cst_15 = arith.constant 0.000000e+00 : f32
    %28 = vector.broadcast %cst_15 : f32 to vector<32x64xf32>
    %29 = arith.maximumf %27, %28 : vector<32x64xf32>
    %30 = arith.truncf %29 : vector<32x64xf32> to vector<32x64xbf16>
    %c0_16 = arith.constant 0 : index
    %c0_17 = arith.constant 0 : index
    %c0_18 = arith.constant 0 : index
    %31 = vector.load %arg7[%c0_16, %c0_17, %c0_18] : memref<1x32x64xbf16, #tpu.memory_space<vmem>>, vector<1x32x64xbf16>
    %32 = vector.shape_cast %31 : vector<1x32x64xbf16> to vector<32x64xbf16>
    %33 = vector.shape_cast %30 : vector<32x64xbf16> to vector<1x32x64xbf16>
    tpu.vector_store %arg7[%c0_16, %c0_17, %c0_18], %33 {strides = array<i32>} : memref<1x32x64xbf16, #tpu.memory_space<vmem>>, vector<1x32x64xbf16>,
    %c0_i32 = arith.constant 0 : i32
    %34 = arith.cmpi eq, %arg1, %c0_i32 : i32
    %35 = arith.extui %34 : i1 to i32
    %c0_i32_19 = arith.constant 0 : i32
    %36 = arith.cmpi ne, %35, %c0_i32_19 : i32
    scf.if %36 {
      %cst_28 = arith.constant 0.000000e+00 : f32
      %51 = vector.broadcast %cst_28 : f32 to vector<32x2xf32>
      %c0_29 = arith.constant 0 : index
      %c0_30 = arith.constant 0 : index
      %c0_31 = arith.constant 0 : index
      %52 = vector.load %arg8[%c0_29, %c0_30, %c0_31] : memref<1x32x2xf32, #tpu.memory_space<vmem>>, vector<1x32x2xf32>
      %53 = vector.shape_cast %52 : vector<1x32x2xf32> to vector<32x2xf32>
      %54 = vector.shape_cast %51 : vector<32x2xf32> to vector<1x32x2xf32>
      tpu.vector_store %arg8[%c0_29, %c0_30, %c0_31], %54 {strides = array<i32>} : memref<1x32x2xf32, #tpu.memory_space<vmem>>, vector<1x32x2xf32>,
    } else {
    }
    %c0_20 = arith.constant 0 : index
    %c0_21 = arith.constant 0 : index
    %c0_22 = arith.constant 0 : index
    %37 = vector.load %arg8[%c0_20, %c0_21, %c0_22] : memref<1x32x2xf32, #tpu.memory_space<vmem>>, vector<1x32x2xf32>
    %38 = vector.shape_cast %37 : vector<1x32x2xf32> to vector<32x2xf32>
    %cst_23 = arith.constant dense<0.000000e+00> : vector<32xf32>
    %39 = vector.multi_reduction <add>, %29, %cst_23 [1] : vector<32x64xf32> to vector<32xf32>
    %40 = vector.shape_cast %39 : vector<32xf32> to vector<32x1xf32>
    %cst_24 = arith.constant dense<0xFF800000> : vector<32xf32>
    %41 = vector.multi_reduction <maximumf>, %29, %cst_24 [1] : vector<32x64xf32> to vector<32xf32>
    %42 = vector.shape_cast %41 : vector<32xf32> to vector<32x1xf32>
    %43 = vector.extract_strided_slice %38 {offsets = [0, 0], sizes = [32, 1], strides = [1, 1]} : vector<32x2xf32> to vector<32x1xf32>
    %44 = arith.addf %43, %40 : vector<32x1xf32>
    %45 = vector.extract_strided_slice %38 {offsets = [0, 1], sizes = [32, 1], strides = [1, 1]} : vector<32x2xf32> to vector<32x1xf32>
    %46 = arith.maximumf %45, %42 : vector<32x1xf32>
    %47 = tpu.concatenate %44, %46 in 1 : vector<32x1xf32>, vector<32x1xf32> -> vector<32x2xf32>
    %c0_25 = arith.constant 0 : index
    %c0_26 = arith.constant 0 : index
    %c0_27 = arith.constant 0 : index
    %48 = vector.load %arg8[%c0_25, %c0_26, %c0_27] : memref<1x32x2xf32, #tpu.memory_space<vmem>>, vector<1x32x2xf32>
    %49 = vector.shape_cast %48 : vector<1x32x2xf32> to vector<32x2xf32>
    %50 = vector.shape_cast %47 : vector<32x2xf32> to vector<1x32x2xf32>
    tpu.vector_store %arg8[%c0_25, %c0_26, %c0_27], %50 {strides = array<i32>} : memref<1x32x2xf32, #tpu.memory_space<vmem>>, vector<1x32x2xf32>,
    return
  }
  func.func @transform_0(%arg0: i32, %arg1: i32) -> (i32, i32, i32) {
    %c0_i32 = arith.constant 0 : i32
    %c0_i32_0 = arith.constant 0 : i32
    return %arg0, %c0_i32, %arg1 : i32, i32, i32
  }
  func.func @transform_1(%arg0: i32, %arg1: i32) -> (i32, i32) {
    %c0_i32 = arith.constant 0 : i32
    %c0_i32_0 = arith.constant 0 : i32
    %c0_i32_1 = arith.constant 0 : i32
    return %c0_i32, %c0_i32_0 : i32, i32
  }
  func.func @transform_2(%arg0: i32, %arg1: i32) -> (i32, i32) {
    %c0_i32 = arith.constant 0 : i32
    %c0_i32_0 = arith.constant 0 : i32
    %c0_i32_1 = arith.constant 0 : i32
    return %c0_i32, %c0_i32_0 : i32, i32
  }
  func.func @transform_3(%arg0: i32, %arg1: i32) -> (i32, i32) {
    %c0_i32 = arith.constant 0 : i32
    %c0_i32_0 = arith.constant 0 : i32
    %c0_i32_1 = arith.constant 0 : i32
    return %c0_i32, %c0_i32_0 : i32, i32
  }
  func.func @transform_4(%arg0: i32, %arg1: i32) -> (i32, i32) {
    %c0_i32 = arith.constant 0 : i32
    %c0_i32_0 = arith.constant 0 : i32
    %c0_i32_1 = arith.constant 0 : i32
    return %c0_i32, %c0_i32_0 : i32, i32
  }
  func.func @transform_5(%arg0: i32, %arg1: i32) -> (i32, i32, i32) {
    %c0_i32 = arith.constant 0 : i32
    %c0_i32_0 = arith.constant 0 : i32
    return %arg0, %c0_i32, %arg1 : i32, i32, i32
  }
  func.func @transform_6(%arg0: i32, %arg1: i32) -> (i32, i32, i32) {
    %c0_i32 = arith.constant 0 : i32
    %c0_i32_0 = arith.constant 0 : i32
    %c0_i32_1 = arith.constant 0 : i32
    return %arg0, %c0_i32, %c0_i32_0 : i32, i32, i32
  }
}

</mosaic_0001>

<llo_original>
// kernel: tpu_custom_call.1
$region0: #{tpu_custom_call.1}
  #allocation0 [shape = 'u32[]', space=smem, size = 0x4, offset = 0x4, fixed_abs, tag = 'smem constant byte address 0x4 - core index']
  #allocation1 [shape = 'u32[72,128]{1,0:T(1,128)}', space=vmem, size = 0x9000, scoped, tag = 'internal scratch']
  %s0 = inlined_call_operand.vmem [shape: bf16[2,128,64], index: 0, kind: input, shape index: {}]
  %s1 = inlined_call_operand.vmem [shape: bf16[64,128], index: 1, kind: input, shape index: {}]
  %s2 = inlined_call_operand.vmem [shape: bf16[48,64], index: 2, kind: input, shape index: {}]
  %s3 = inlined_call_operand.vmem [shape: bf16[32,16], index: 3, kind: input, shape index: {}]
  %s4 = inlined_call_operand.vmem [shape: f32[112,1], index: 4, kind: input, shape index: {}]
  %s5 = inlined_call_operand.hbm [shape: bf16[2,32,64], index: 5, kind: output, shape index: {0}]
  %s6 = inlined_call_operand.vmem [shape: f32[2,32,2], index: 6, kind: output, shape index: {1}]
  %7 = xla_tuple %s5, %s6
  %s8 = sld [smem:[#allocation0]]
  $region65: #{tpu_custom_call.1} parent=0
    _
  %s10 = ssub.s32 1, %s8
  %s11 = scalar_select 0, %s10, %s8
  $region1: #{tpu_custom_call.1} parent=0
    #allocation2 [shape = 'u8[16384]{0}', space=vmem, size = 0x4000, scoped, tag = 'output window, operand 0']
    #allocation3 [shape = 's32[2]{0}', space=sflag, size = 0x8, scoped, tag = 'scoped memory for tpu_custom_call.1']
    %12 = vsyncpa [#allocation3], 0
    %s13 = scalar_lea.sflag [#allocation3], 1
    %14 = vsyncpa %s13, 0
    loop: start=0, step=1, limit=4
    $region2: #{tpu_custom_call.1} parent=1 // loop_pre_header
      _
    $region3: #{tpu_custom_call.1} parent=1 // loop_header
      %s16 = sphi 0, %s20
      %p17 = scmp.ge.s32.totalorder %s16, 4
      %s23 = sphi 0, %s35
      %s24 = sphi 0, %s31
      %s25 = sphi 0, %s23
      %s26 = sphi 0, %s24
      %s27 = sphi 0, %s25
      %s28 = sphi 0, %s26
      %s40 = sphi 0, %s42
      %s43 = sphi 0, %s40
      %s44 = sphi 0, %s43
      %s60 = sphi 0, %s44
      %s64 = sphi 0, %s64
      %s66 = sphi 0, %s64
      %s67 = sphi 0, %s66
      %s81 = sphi 0, %s67
      %s85 = sphi 0, %s85
      %s87 = sphi 0, %s85
      %s88 = sphi 0, %s87
      %s102 = sphi 0, %s88
      %s106 = sphi 0, %s106
      %s108 = sphi 0, %s106
      %s109 = sphi 0, %s108
      %s123 = sphi 0, %s109
      %s127 = sphi 0, %s127
      %s129 = sphi 0, %s127
      %s130 = sphi 0, %s129
      %s144 = sphi 0, %s130
      %s152 = sphi 0, %s154
      %s155 = sphi 0, %s152
      %s156 = sphi 0, %s155
      %s172 = sphi 0, %s156
      %s178 = sphi 0, %s180
      %s181 = sphi 0, %s178
      %s182 = sphi 0, %s181
      %s198 = sphi 0, %s182
    $region4: #{tpu_custom_call.1} parent=1 // loop_header_branch
      %19 = sbr.rel (%p17) target = $region8
    $region5: #{tpu_custom_call.1} parent=1 // loop_body
      %s21 = ssub.s32 %s16, 1
      %s22 = ssub.s32 %s16, 2
      %s29 = sadd.s32 1, %s24
      %p30 = scmp.ge.s32.totalorder %s29, 1
      %s31 = scalar_select %p30, 0, %s29
      %s32 = sadd.s32 1, %s23
      %s33 = scalar_select %p30, %s32, %s23
      %p34 = scmp.ge.s32.totalorder %s33, 2
      %s35 = scalar_select %p34, 0, %s33
      %s36 = ssub.s32 %s23, %s35
      %s37 = ssub.s32 %s24, %s31
      %s38 = sor.u32 %s36, %s37
      %p39 = scmp.eq.s32.totalorder %s38, 0
      %s41 = sadd.s32 %s40, 1
      %s42 = scalar_select %p39, %s40, %s41
      %p45 = pneg %p39
      %p46 = scmp.eq.s32.totalorder %s16, 1
      %p47 = por %p45, %p46
      %p48 = scmp.ne.s32.totalorder %s40, %s43
      %p49 = scmp.eq.s32.totalorder %s16, 0
      %p50 = por %p48, %p49
      %p51 = scmp.ne.s32.totalorder %s40, %s43
      %p52 = scmp.eq.s32.totalorder %s21, 1
      %p53 = por %p51, %p52
      %p54 = scmp.ne.s32.totalorder %s43, %s44
      %p55 = scmp.eq.s32.totalorder %s21, 0
      %p56 = por %p54, %p55
      %p57 = scmp.ne.s32.totalorder %s43, %s44
      %p58 = scmp.eq.s32.totalorder %s22, 1
      %p59 = por %p57, %p58
      %p61 = scmp.ne.s32.totalorder %s44, %s60
      %p62 = scmp.eq.s32.totalorder %s22, 0
      %p63 = por %p61, %p62
      %s65 = sadd.s32 %s64, 1
      %p68 = scmp.eq.s32.totalorder %s16, 1
      %p69 = scmp.ne.s32.totalorder %s64, %s66
      %p70 = scmp.eq.s32.totalorder %s16, 0
      %p71 = por %p69, %p70
      %p72 = scmp.ne.s32.totalorder %s64, %s66
      %p73 = scmp.eq.s32.totalorder %s21, 1
      %p74 = por %p72, %p73
      %p75 = scmp.ne.s32.totalorder %s66, %s67
      %p76 = scmp.eq.s32.totalorder %s21, 0
      %p77 = por %p75, %p76
      %p78 = scmp.ne.s32.totalorder %s66, %s67
      %p79 = scmp.eq.s32.totalorder %s22, 1
      %p80 = por %p78, %p79
      %p82 = scmp.ne.s32.totalorder %s67, %s81
      %p83 = scmp.eq.s32.totalorder %s22, 0
      %p84 = por %p82, %p83
      %s86 = sadd.s32 %s85, 1
      %p89 = scmp.eq.s32.totalorder %s16, 1
      %p90 = scmp.ne.s32.totalorder %s85, %s87
      %p91 = scmp.eq.s32.totalorder %s16, 0
      %p92 = por %p90, %p91
      %p93 = scmp.ne.s32.totalorder %s85, %s87
      %p94 = scmp.eq.s32.totalorder %s21, 1
      %p95 = por %p93, %p94
      %p96 = scmp.ne.s32.totalorder %s87, %s88
      %p97 = scmp.eq.s32.totalorder %s21, 0
      %p98 = por %p96, %p97
      %p99 = scmp.ne.s32.totalorder %s87, %s88
      %p100 = scmp.eq.s32.totalorder %s22, 1
      %p101 = por %p99, %p100
      %p103 = scmp.ne.s32.totalorder %s88, %s102
      %p104 = scmp.eq.s32.totalorder %s22, 0
      %p105 = por %p103, %p104
      %s107 = sadd.s32 %s106, 1
      %p110 = scmp.eq.s32.totalorder %s16, 1
      %p111 = scmp.ne.s32.totalorder %s106, %s108
      %p112 = scmp.eq.s32.totalorder %s16, 0
      %p113 = por %p111, %p112
      %p114 = scmp.ne.s32.totalorder %s106, %s108
      %p115 = scmp.eq.s32.totalorder %s21, 1
      %p116 = por %p114, %p115
      %p117 = scmp.ne.s32.totalorder %s108, %s109
      %p118 = scmp.eq.s32.totalorder %s21, 0
      %p119 = por %p117, %p118
      %p120 = scmp.ne.s32.totalorder %s108, %s109
      %p121 = scmp.eq.s32.totalorder %s22, 1
      %p122 = por %p120, %p121
      %p124 = scmp.ne.s32.totalorder %s109, %s123
      %p125 = scmp.eq.s32.totalorder %s22, 0
      %p126 = por %p124, %p125
      %s128 = sadd.s32 %s127, 1
      %p131 = scmp.eq.s32.totalorder %s16, 1
      %p132 = scmp.ne.s32.totalorder %s127, %s129
      %p133 = scmp.eq.s32.totalorder %s16, 0
      %p134 = por %p132, %p133
      %p135 = scmp.ne.s32.totalorder %s127, %s129
      %p136 = scmp.eq.s32.totalorder %s21, 1
      %p137 = por %p135, %p136
      %p138 = scmp.ne.s32.totalorder %s129, %s130
      %p139 = scmp.eq.s32.totalorder %s21, 0
      %p140 = por %p138, %p139
      %p141 = scmp.ne.s32.totalorder %s129, %s130
      %p142 = scmp.eq.s32.totalorder %s22, 1
      %p143 = por %p141, %p142
      %p145 = scmp.ne.s32.totalorder %s130, %s144
      %p146 = scmp.eq.s32.totalorder %s22, 0
      %p147 = por %p145, %p146
      %s148 = ssub.s32 %s23, %s35
      %s149 = ssub.s32 %s24, %s31
      %s150 = sor.u32 %s148, %s149
      %p151 = scmp.eq.s32.totalorder %s150, 0
      %s153 = sadd.s32 %s152, 1
      %s154 = scalar_select %p151, %s152, %s153
      %p157 = pneg %p151
      %p158 = scmp.eq.s32.totalorder %s16, 1
      %p159 = por %p157, %p158
      %p160 = scmp.ne.s32.totalorder %s152, %s155
      %p161 = scmp.eq.s32.totalorder %s16, 0
      %p162 = por %p160, %p161
      %p163 = scmp.ne.s32.totalorder %s152, %s155
      %p164 = scmp.eq.s32.totalorder %s21, 1
      %p165 = por %p163, %p164
      %p166 = scmp.ne.s32.totalorder %s155, %s156
      %p167 = scmp.eq.s32.totalorder %s21, 0
      %p168 = por %p166, %p167
      %p169 = scmp.ne.s32.totalorder %s155, %s156
      %p170 = scmp.eq.s32.totalorder %s22, 1
      %p171 = por %p169, %p170
      %p173 = scmp.ne.s32.totalorder %s156, %s172
      %p174 = scmp.eq.s32.totalorder %s22, 0
      %p175 = por %p173, %p174
      %s176 = ssub.s32 %s23, %s35
      %p177 = scmp.eq.s32.totalorder %s176, 0
      %s179 = sadd.s32 %s178, 1
      %s180 = scalar_select %p177, %s178, %s179
      %p183 = pneg %p177
      %p184 = scmp.eq.s32.totalorder %s16, 1
      %p185 = por %p183, %p184
      %p186 = scmp.ne.s32.totalorder %s178, %s181
      %p187 = scmp.eq.s32.totalorder %s16, 0
      %p188 = por %p186, %p187
      %p189 = scmp.ne.s32.totalorder %s178, %s181
      %p190 = scmp.eq.s32.totalorder %s21, 1
      %p191 = por %p189, %p190
      %p192 = scmp.ne.s32.totalorder %s181, %s182
      %p193 = scmp.eq.s32.totalorder %s21, 0
      %p194 = por %p192, %p193
      %p195 = scmp.ne.s32.totalorder %s181, %s182
      %p196 = scmp.eq.s32.totalorder %s22, 1
      %p197 = por %p195, %p196
      %p199 = scmp.ne.s32.totalorder %s182, %s198
      %p200 = scmp.eq.s32.totalorder %s22, 0
      %p201 = por %p199, %p200
      %p202 = scmp.le.s32.totalorder 1, %s16
      %p203 = scmp.lt.s32.totalorder %s16, 3
      %p204 = pnand %p202, %p203
      %p205 = pneg %p204
      // Predicated region
      $region9: #{tpu_custom_call.1} parent=5 // pred_check
        _
      $region10: #{tpu_custom_call.1} parent=5 // pred_check_branch
        %207 = sbr.rel (%p204) target = $region12
      $region11: #{tpu_custom_call.1} parent=5 // pred_region
        %s208 = ssub.s32 %s16, 1
        // Predicated region
        $region13: #{tpu_custom_call.1} parent=11 // pred_check
          %p209 = pneg %p77
        $region14: #{tpu_custom_call.1} parent=11 // pred_check_branch
          %211 = sbr.rel (%p209) target = $region16
        $region15: #{tpu_custom_call.1} parent=11 // pred_region
          _
        $region16: #{tpu_custom_call.1} parent=11 // pred_fallthru
          _
        // Predicated region
        $region17: #{tpu_custom_call.1} parent=11 // pred_check
          %p212 = pneg %p98
        $region18: #{tpu_custom_call.1} parent=11 // pred_check_branch
          %214 = sbr.rel (%p212) target = $region20
        $region19: #{tpu_custom_call.1} parent=11 // pred_region
          _
        $region20: #{tpu_custom_call.1} parent=11 // pred_fallthru
          _
        // Predicated region
        $region21: #{tpu_custom_call.1} parent=11 // pred_check
          %p215 = pneg %p119
        $region22: #{tpu_custom_call.1} parent=11 // pred_check_branch
          %217 = sbr.rel (%p215) target = $region24
        $region23: #{tpu_custom_call.1} parent=11 // pred_region
          _
        $region24: #{tpu_custom_call.1} parent=11 // pred_fallthru
          _
        // Predicated region
        $region25: #{tpu_custom_call.1} parent=11 // pred_check
          %p218 = pneg %p140
        $region26: #{tpu_custom_call.1} parent=11 // pred_check_branch
          %220 = sbr.rel (%p218) target = $region28
        $region27: #{tpu_custom_call.1} parent=11 // pred_region
          _
        $region28: #{tpu_custom_call.1} parent=11 // pred_fallthru
          _
      $region12: #{tpu_custom_call.1} parent=5 // pred_fallthru
        _
      %p221 = scmp.lt.s32.totalorder %s16, 2
      // Predicated region
      $region29: #{tpu_custom_call.1} parent=5 // pred_check
        %p222 = pneg %p221
      $region30: #{tpu_custom_call.1} parent=5 // pred_check_branch
        %224 = sbr.rel (%p222) target = $region32
      $region31: #{tpu_custom_call.1} parent=5 // pred_region
        // Predicated region
        $region33: #{tpu_custom_call.1} parent=31 // pred_check
          %p225 = pneg %p50
        $region34: #{tpu_custom_call.1} parent=31 // pred_check_branch
          %227 = sbr.rel (%p225) target = $region36
        $region35: #{tpu_custom_call.1} parent=31 // pred_region
          %p228 = scmp.lt.s32.totalorder %s23, 1
          %s229 = scalar_select %p228, %s23, 1
          %p230 = scmp.lt.s32.totalorder %s24, 0
          %s231 = scalar_select %p230, %s24, 0
          %s232 = smul.addr %s229, 16
          %s233 = sadd.s32 %s231, %s232
          %s234 = smul.addr %s233, 4
          %s235 = scalar_lea.vmem %s0, %s234
        $region36: #{tpu_custom_call.1} parent=31 // pred_fallthru
          _
      $region32: #{tpu_custom_call.1} parent=5 // pred_fallthru
        _
      %p236 = scmp.le.s32.totalorder 1, %s16
      %p237 = scmp.lt.s32.totalorder %s16, 3
      %p238 = pnand %p236, %p237
      %p239 = pneg %p238
      // Predicated region
      $region37: #{tpu_custom_call.1} parent=5 // pred_check
        _
      $region38: #{tpu_custom_call.1} parent=5 // pred_check_branch
        %241 = sbr.rel (%p238) target = $region40
      $region39: #{tpu_custom_call.1} parent=5 // pred_region
        %s242 = ssub.s32 %s16, 1
        %p243 = scmp.lt.s32.totalorder %s25, 1
        %s244 = scalar_select %p243, %s25, 1
        %p245 = scmp.lt.s32.totalorder %s26, 0
        %s246 = scalar_select %p245, %s26, 0
        %s247 = smul.addr %s244, 16
        %s248 = sadd.s32 %s246, %s247
        %s249 = smul.addr %s248, 4
        %s250 = scalar_lea.vmem %s0, %s249
        %p251 = pneg %p56
        %p252 = pneg %p53
        %p253 = pneg %p77
        %p254 = pneg %p74
        %p255 = pneg %p98
        %p256 = pneg %p95
        %p257 = pneg %p119
        %p258 = pneg %p116
        %p259 = pneg %p140
        %p260 = pneg %p137
        %p261 = pneg %p168
        %p262 = pneg %p165
        %s263 = sand.u32 %s155, 1
        %s264 = scalar_lea.sflag [#allocation3], %s263
        %s265 = sand.u32 %s155, 1
        %s266 = smul.addr %s265, 16
        %s267 = scalar_lea.vmem [#allocation2], %s266
        %p268 = pneg %p194
        %p269 = pneg %p191
        %p270 = scmp.lt.s32.totalorder %s25, 1
        %s271 = scalar_select %p270, %s25, 1
        %s272 = smul.addr %s271, 4
        %s273 = smul.addr %s272, 8
        %s274 = scalar_lea.vmem %s6, %s273
        %p275 = scmp.lt.s32.totalorder %s25, 1
        %s276 = scalar_select %p275, %s25, 1
        %p277 = scmp.lt.s32.totalorder %s26, 0
        %s278 = scalar_select %p277, %s26, 0
        %s279 = smul.addr %s276, 16
        %s280 = sadd.s32 %s278, %s279
        %s281 = smul.addr %s280, 4
        %s282 = scalar_lea.vmem %s0, %s281
        %p283 = scmp.lt.s32.totalorder %s25, 1
        %s284 = scalar_select %p283, %s25, 1
        %s285 = smul.addr %s284, 4
        %s286 = smul.addr %s285, 8
        %s287 = scalar_lea.vmem %s6, %s286
        %v289 = vld [vmem:[%s282] sm:$0xf]
        %v290 = vld [vmem:[%s282 + $0x4] sm:$0xf]
        %v291 = vld [vmem:[%s282 + $0x8] sm:$0xf]
        %v292 = vld [vmem:[%s282 + $0xc] sm:$0xf]
        %v293 = vld [vmem:[%s282 + $0x10] sm:$0xf]
        %v294 = vld [vmem:[%s282 + $0x14] sm:$0xf]
        %v295 = vld [vmem:[%s282 + $0x18] sm:$0xf]
        %v296 = vld [vmem:[%s282 + $0x1c] sm:$0xf]
        %v297 = vld [vmem:[%s282 + $0x20] sm:$0xf]
        %v298 = vld [vmem:[%s282 + $0x24] sm:$0xf]
        %v299 = vld [vmem:[%s282 + $0x28] sm:$0xf]
        %v300 = vld [vmem:[%s282 + $0x2c] sm:$0xf]
        %v301 = vld [vmem:[%s282 + $0x30] sm:$0xf]
        %v302 = vld [vmem:[%s282 + $0x34] sm:$0xf]
        %v303 = vld [vmem:[%s282 + $0x38] sm:$0xf]
        %v304 = vld [vmem:[%s282 + $0x3c] sm:$0xf]
        %v305 = vld [vmem:[%s4] sm:$0xff]
        %v306 = vld [vmem:[%s4 + $0x8] sm:$0xff]
        %v307 = vld [vmem:[%s4 + $0x10] sm:$0xff]
        %v308 = vld [vmem:[%s4 + $0x18] sm:$0xff]
        %v309 = vld [vmem:[%s4 + $0x20] sm:$0xff]
        %v310 = vld [vmem:[%s4 + $0x28] sm:$0xff]
        %v311 = vld [vmem:[%s4 + $0x30] sm:$0xff]
        %v312 = vld [vmem:[%s4 + $0x38] sm:$0xff]
        %v313 = vld [vmem:[%s4 + $0x40] sm:$0xff]
        %v314 = vld [vmem:[%s4 + $0x48] sm:$0xff]
        %v315 = vld [vmem:[%s4 + $0x50] sm:$0xff]
        %v316 = vld [vmem:[%s4 + $0x58] sm:$0xff]
        %v317 = vld [vmem:[%s4 + $0x60] sm:$0xff]
        %v318 = vld [vmem:[%s4 + $0x68] sm:$0xff]
        %v319 = vld [vmem:[%s2] sm:$0xf]
        %v320 = vld [vmem:[%s2 + $0x4] sm:$0xf]
        %v321 = vld [vmem:[%s2 + $0x8] sm:$0xf]
        %v322 = vld [vmem:[%s2 + $0xc] sm:$0xf]
        %v323 = vld [vmem:[%s2 + $0x10] sm:$0xf]
        %v324 = vld [vmem:[%s2 + $0x14] sm:$0xf]
        %v325 = vld [vmem:[%s1] sm:$0xf]
        %v326 = vld [vmem:[%s1 + $0x4] sm:$0xf]
        %v327 = vld [vmem:[%s1 + $0x8] sm:$0xf]
        %v328 = vld [vmem:[%s1 + $0xc] sm:$0xf]
        %v329 = vld [vmem:[%s1 + $0x10] sm:$0xf]
        %v330 = vld [vmem:[%s1 + $0x14] sm:$0xf]
        %v331 = vld [vmem:[%s1 + $0x18] sm:$0xf]
        %v332 = vld [vmem:[%s1 + $0x1c] sm:$0xf]
        %334 = vset.pattern.permute.xlu0 0
        %335 = vperm.xlu0 %334, %v305
        %v336 = vpop.permute.xlu0 %335
        %339 = vset.pattern.permute.xlu0 0
        %340 = vperm.xlu0 %339, %v306
        %v341 = vpop.permute.xlu0 %340
        %344 = vset.pattern.permute.xlu0 0
        %345 = vperm.xlu0 %344, %v307
        %v346 = vpop.permute.xlu0 %345
        %349 = vset.pattern.permute.xlu0 0
        %350 = vperm.xlu0 %349, %v308
        %v351 = vpop.permute.xlu0 %350
        %354 = vset.pattern.permute.xlu0 0
        %355 = vperm.xlu0 %354, %v309
        %v356 = vpop.permute.xlu0 %355
        %359 = vset.pattern.permute.xlu0 0
        %360 = vperm.xlu0 %359, %v310
        %v361 = vpop.permute.xlu0 %360
        %364 = vset.pattern.permute.xlu0 0
        %365 = vperm.xlu0 %364, %v311
        %v366 = vpop.permute.xlu0 %365
        %369 = vset.pattern.permute.xlu0 0
        %370 = vperm.xlu0 %369, %v312
        %v371 = vpop.permute.xlu0 %370
        %v381 = vunpack.c.l.b16 %v325
        %v382 = vunpack.c.l.b16 %v326
        %v383 = vunpack.c.l.b16 %v327
        %v384 = vunpack.c.l.b16 %v328
        %v385 = vunpack.c.l.b16 %v329
        %v386 = vunpack.c.l.b16 %v330
        %v387 = vunpack.c.l.b16 %v331
        %v388 = vunpack.c.l.b16 %v332
        %v389 = vpack.c.b16 %v382, %v381
        %v390 = vpack.c.b16 %v384, %v383
        %v391 = vpack.c.b16 %v386, %v385
        %v392 = vpack.c.b16 %v388, %v387
        %v413 = vunpack.c.l.b16 %v289
        %v414 = vunpack.c.l.b16 %v290
        %v415 = vunpack.c.l.b16 %v291
        %v416 = vunpack.c.l.b16 %v292
        %v417 = vunpack.c.l.b16 %v293
        %v418 = vunpack.c.l.b16 %v294
        %v419 = vunpack.c.l.b16 %v295
        %v420 = vunpack.c.l.b16 %v296
        %v421 = vunpack.c.l.b16 %v297
        %v422 = vunpack.c.l.b16 %v298
        %v423 = vunpack.c.l.b16 %v299
        %v424 = vunpack.c.l.b16 %v300
        %v425 = vunpack.c.l.b16 %v301
        %v426 = vunpack.c.l.b16 %v302
        %v427 = vunpack.c.l.b16 %v303
        %v428 = vunpack.c.l.b16 %v304
        %v429 = vpack.c.b16 %v414, %v413
        %v430 = vpack.c.b16 %v416, %v415
        %v431 = vpack.c.b16 %v418, %v417
        %v432 = vpack.c.b16 %v420, %v419
        %v433 = vpack.c.b16 %v422, %v421
        %v434 = vpack.c.b16 %v424, %v423
        %v435 = vpack.c.b16 %v426, %v425
        %v436 = vpack.c.b16 %v428, %v427
        %445 = vmatpush.bf16.msra.mxu0 %v436
        %446 = vmatpush.bf16.msra.mxu0 %v435
        %447 = vmatpush.bf16.msra.mxu0 %v434
        %448 = vmatpush.bf16.msra.mxu0 %v433
        %449 = vmatpush.bf16.msra.mxu0 %v432
        %450 = vmatpush.bf16.msra.mxu0 %v431
        %451 = vmatpush.bf16.msra.mxu0 %v430
        %452 = vmatpush.bf16.msra.mxu0 %v429
        %453 = vmatmul.bf16.gmra.mxu0 %v389
        %v454 = vpop.f32.mrf.mxu0
        %v455 = vadd.f32 %v336, %v454
        %v456 = vpop.f32.mrf.mxu0
        %v457 = vadd.f32 %v341, %v456
        %458 = vmatmul.bf16.gmra.mxu0 %v390
        %v459 = vpop.f32.mrf.mxu0
        %v460 = vadd.f32 %v346, %v459
        %v461 = vpop.f32.mrf.mxu0
        %v462 = vadd.f32 %v351, %v461
        %463 = vmatmul.bf16.gmra.mxu0 %v391
        %v464 = vpop.f32.mrf.mxu0
        %v465 = vadd.f32 %v356, %v464
        %v466 = vpop.f32.mrf.mxu0
        %v467 = vadd.f32 %v361, %v466
        %468 = vmatmul.bf16.gmra.mxu0 %v392
        %v469 = vpop.f32.mrf.mxu0
        %v470 = vadd.f32 %v366, %v469
        %v471 = vpop.f32.mrf.mxu0
        %v472 = vadd.f32 %v371, %v471
        %473 = vdwg.mxu0
        %v474 = vmax.f32 %v455, 0.0
        %v475 = vmax.f32 %v457, 0.0
        %v476 = vmax.f32 %v460, 0.0
        %v477 = vmax.f32 %v462, 0.0
        %v478 = vmax.f32 %v465, 0.0
        %v479 = vmax.f32 %v467, 0.0
        %v480 = vmax.f32 %v470, 0.0
        %v481 = vmax.f32 %v472, 0.0
        %v482 = vpack.c.bf16 %v475, %v474
        %v483 = vpack.c.bf16 %v477, %v476
        %v484 = vpack.c.bf16 %v479, %v478
        %v485 = vpack.c.bf16 %v481, %v480
        %487 = vset.pattern.permute.xlu0 0
        %488 = vperm.xlu0 %487, %v313
        %v489 = vpop.permute.xlu0 %488
        %492 = vset.pattern.permute.xlu0 0
        %493 = vperm.xlu0 %492, %v314
        %v494 = vpop.permute.xlu0 %493
        %v498 = vunpack.c.l.b16 %v319
        %v499 = vunpack.c.l.b16 %v320
        %v500 = vpack.c.b16 %v499, %v498
        %vm501 = vcmask 523264
        %v503 = vsel %vm501, %v500, 0
        %505 = vmatpush.bf16.msra.mxu0 0
        %506 = vmatpush.bf16.msra.mxu0 0
        %507 = vmatpush.bf16.msra.mxu0 0
        %508 = vmatpush.bf16.msra.mxu0 0
        %509 = vmatpush.bf16.msra.mxu0 %v485
        %510 = vmatpush.bf16.msra.mxu0 %v484
        %511 = vmatpush.bf16.msra.mxu0 %v483
        %512 = vmatpush.bf16.msra.mxu0 %v482
        %513 = vmatmul.bf16.gmra.mxu0 %v503
        %v514 = vpop.f32.mrf.mxu0
        %v515 = vadd.f32 %v489, %v514
        %v516 = vpop.f32.mrf.mxu0
        %v517 = vadd.f32 %v494, %v516
        %518 = vdwg.mxu0
        %v519 = vmax.f32 %v515, 0.0
        %v520 = vmax.f32 %v517, 0.0
        %v521 = vld [vmem:[%s3] sm:$0xf]
        %v522 = vld [vmem:[%s3 + $0x4] sm:$0xf]
        %v523 = vld [vmem:[%s3 + $0x8] sm:$0xf]
        %v524 = vld [vmem:[%s3 + $0xc] sm:$0xf]
        %v525 = vpack.c.bf16 %v520, %v519
        %v530 = vunpack.c.l.b16 %v321
        %v531 = vunpack.c.l.b16 %v322
        %v532 = vunpack.c.l.b16 %v323
        %v533 = vunpack.c.l.b16 %v324
        %v534 = vpack.c.b16 %v531, %v530
        %v535 = vpack.c.b16 %v533, %v532
        %v537 = vsel %vm501, %v534, 0
        %v540 = vsel %vm501, %v535, 0
        %542 = vmatpush.bf16.msra.mxu0 0
        %543 = vmatpush.bf16.msra.mxu0 0
        %544 = vmatpush.bf16.msra.mxu0 0
        %545 = vmatpush.bf16.msra.mxu0 0
        %546 = vmatpush.bf16.msra.mxu0 %v485
        %547 = vmatpush.bf16.msra.mxu0 %v484
        %548 = vmatpush.bf16.msra.mxu0 %v483
        %549 = vmatpush.bf16.msra.mxu0 %v482
        %550 = vmatmul.bf16.gmra.mxu0 %v537
        %v551 = vpop.f32.mrf.mxu0
        %v552 = vadd.f32 0.0, %v551
        %v553 = vpop.f32.mrf.mxu0
        %v554 = vadd.f32 0.0, %v553
        %555 = vmatmul.bf16.gmra.mxu0 %v540
        %v556 = vpop.f32.mrf.mxu0
        %v557 = vadd.f32 0.0, %v556
        %v558 = vpop.f32.mrf.mxu0
        %v559 = vadd.f32 0.0, %v558
        %560 = vdwg.mxu0
        %v565 = vunpack.c.l.b16 %v521
        %v566 = vunpack.c.l.b16 %v522
        %v567 = vunpack.c.l.b16 %v523
        %v568 = vunpack.c.l.b16 %v524
        %v569 = vpack.c.b16 %v566, %v565
        %v570 = vpack.c.b16 %v568, %v567
        %vm571 = vcmask 130048
        %v573 = vsel %vm571, %v569, 0
        %v576 = vsel %vm571, %v570, 0
        %578 = vmatpush.bf16.msra.mxu0 0
        %579 = vmatpush.bf16.msra.mxu0 0
        %580 = vmatpush.bf16.msra.mxu0 0
        %581 = vmatpush.bf16.msra.mxu0 0
        %582 = vmatpush.bf16.msra.mxu0 0
        %583 = vmatpush.bf16.msra.mxu0 0
        %584 = vmatpush.bf16.msra.mxu0 0
        %585 = vmatpush.bf16.msra.mxu0 %v525
        %586 = vmatmul.bf16.gmra.mxu0 %v573
        %v587 = vpop.f32.mrf.mxu0
        %v588 = vadd.f32 %v552, %v587
        %v589 = vpop.f32.mrf.mxu0
        %v590 = vadd.f32 %v554, %v589
        %591 = vmatmul.bf16.gmra.mxu0 %v576
        %v592 = vpop.f32.mrf.mxu0
        %v593 = vadd.f32 %v557, %v592
        %v594 = vpop.f32.mrf.mxu0
        %v595 = vadd.f32 %v559, %v594
        %596 = vdwg.mxu0
        %598 = vset.pattern.permute.xlu0 0
        %599 = vperm.xlu0 %598, %v315
        %v600 = vpop.permute.xlu0 %599
        %603 = vset.pattern.permute.xlu0 0
        %604 = vperm.xlu0 %603, %v316
        %v605 = vpop.permute.xlu0 %604
        %608 = vset.pattern.permute.xlu0 0
        %609 = vperm.xlu0 %608, %v317
        %v610 = vpop.permute.xlu0 %609
        %613 = vset.pattern.permute.xlu0 0
        %614 = vperm.xlu0 %613, %v318
        %v615 = vpop.permute.xlu0 %614
        %v617 = vadd.f32 %v588, %v600
        %v618 = vadd.f32 %v590, %v605
        %v619 = vadd.f32 %v593, %v610
        %v620 = vadd.f32 %v595, %v615
        %v621 = vmax.f32 %v617, 0.0
        %v622 = vmax.f32 %v618, 0.0
        %v623 = vmax.f32 %v619, 0.0
        %v624 = vmax.f32 %v620, 0.0
        %v625 = vpack.c.bf16 %v621, %v621
        %v626 = vpack.c.bf16 %v622, %v622
        %v627 = vpack.c.bf16 %v623, %v623
        %v628 = vpack.c.bf16 %v624, %v624
        %vm629 = vcmask 519168
        %630 = vst.msk [vmem:[%s267] sm:$0xf] %vm629, %v625
        %631 = vst.msk [vmem:[%s267 + $0x4] sm:$0xf] %vm629, %v626
        %632 = vst.msk [vmem:[%s267 + $0x8] sm:$0xf] %vm629, %v627
        %633 = vst.msk [vmem:[%s267 + $0xc] sm:$0xf] %vm629, %v628
        %p634 = scmp.eq.s32.totalorder %s26, 0
        // Predicated region
        $region41: #{tpu_custom_call.1} parent=39 // pred_check
          %p635 = pneg %p634
        $region42: #{tpu_custom_call.1} parent=39 // pred_check_branch
          %637 = sbr.rel (%p635) target = $region44
        $region43: #{tpu_custom_call.1} parent=39 // pred_region
          %vm638 = vcmask 15360
          %639 = vst.msk [vmem:[%s287] sm:$0xff] %vm638, 0.0
          %640 = vst.msk [vmem:[%s287 + $0x8] sm:$0xff] %vm638, 0.0
          %641 = vst.msk [vmem:[%s287 + $0x10] sm:$0xff] %vm638, 0.0
          %642 = vst.msk [vmem:[%s287 + $0x18] sm:$0xff] %vm638, 0.0
        $region44: #{tpu_custom_call.1} parent=39 // pred_fallthru
          _
        %v643 = vld [vmem:[%s287] sm:$0xff]
        %v644 = vld [vmem:[%s287 + $0x8] sm:$0xff]
        %v645 = vld [vmem:[%s287 + $0x10] sm:$0xff]
        %v646 = vld [vmem:[%s287 + $0x18] sm:$0xff]
        %v647 = vsel %vm501, %v621, 0.0
        %648 = vadd.xlane.f32.xlu0 %v647
        %v649 = vpop.xlane.xlu0 %648
        %v650 = vsel %vm501, %v622, 0.0
        %651 = vadd.xlane.f32.xlu0 %v650
        %v652 = vpop.xlane.xlu0 %651
        %v653 = vsel %vm501, %v623, 0.0
        %654 = vadd.xlane.f32.xlu0 %v653
        %v655 = vpop.xlane.xlu0 %654
        %v656 = vsel %vm501, %v624, 0.0
        %657 = vadd.xlane.f32.xlu0 %v656
        %v658 = vpop.xlane.xlu0 %657
        %v659 = vsel %vm501, %v621, -inf
        %660 = vmax.xlane.f32.xlu0 %v659
        %v661 = vpop.xlane.xlu0 %660
        %v662 = vsel %vm501, %v622, -inf
        %663 = vmax.xlane.f32.xlu0 %v662
        %v664 = vpop.xlane.xlu0 %663
        %v665 = vsel %vm501, %v623, -inf
        %666 = vmax.xlane.f32.xlu0 %v665
        %v667 = vpop.xlane.xlu0 %666
        %v668 = vsel %vm501, %v624, -inf
        %669 = vmax.xlane.f32.xlu0 %v668
        %v670 = vpop.xlane.xlu0 %669
        %v671 = vadd.f32 %v643, %v649
        %v672 = vadd.f32 %v644, %v652
        %v673 = vadd.f32 %v645, %v655
        %v674 = vadd.f32 %v646, %v658
        %v675 = vmax.f32 %v643, %v661
        %v676 = vmax.f32 %v644, %v664
        %v677 = vmax.f32 %v645, %v667
        %v678 = vmax.f32 %v646, %v670
        %vm679 = vcmask 7168
        %v680 = vsel %vm679, %v671, %v675
        %v681 = vsel %vm679, %v672, %v676
        %v682 = vsel %vm679, %v673, %v677
        %v683 = vsel %vm679, %v674, %v678
        %vm684 = vcmask 15360
        %685 = vst.msk [vmem:[%s287] sm:$0xff] %vm684, %v680
        %686 = vst.msk [vmem:[%s287 + $0x8] sm:$0xff] %vm684, %v681
        %687 = vst.msk [vmem:[%s287 + $0x10] sm:$0xff] %vm684, %v682
        %688 = vst.msk [vmem:[%s287 + $0x18] sm:$0xff] %vm684, %v683
        %s689 = sand.u32 %s155, 1
        %s690 = scalar_lea.sflag [#allocation3], %s689
        %s691 = sand.u32 %s155, 1
        %s692 = smul.addr %s691, 16
        %s693 = scalar_lea.vmem [#allocation2], %s692
        %p694 = scmp.lt.s32.totalorder %s25, 1
        %s695 = scalar_select %p694, %s25, 1
        %s696 = smul.addr %s695, 4
        %s697 = smul.addr %s696, 8
        %s698 = scalar_lea.vmem %s6, %s697
        // Predicated region
        $region45: #{tpu_custom_call.1} parent=39 // pred_check
          %p699 = pneg %p165
        $region46: #{tpu_custom_call.1} parent=39 // pred_check_branch
          %701 = sbr.rel (%p699) target = $region48
        $region47: #{tpu_custom_call.1} parent=39 // pred_region
          %703 = vsyncadd %s690, 0
          %s704 = smul.addr %s25, 4
          %s705 = sadd.s32 %s26, %s704
          %s706 = smul.addr %s705, 4
          %s707 = scalar_lea.hbm %s5, %s706
          %s708 = sshll.u32 %s693, 4
          %s709 = int_to_ptr.vmem [resolvable:$true] %s708
          %s710 = sshll.u32 %s707, 4
          %s711 = int_to_ptr.hbm [resolvable:$true] %s710
          %716 = dma.vmem_to_hbm [thread:$0]  %s709, 256, %s711, %s690, 64, 64, 4
        $region48: #{tpu_custom_call.1} parent=39 // pred_fallthru
          _
        // Predicated region
        $region49: #{tpu_custom_call.1} parent=39 // pred_check
          %p717 = pneg %p191
        $region50: #{tpu_custom_call.1} parent=39 // pred_check_branch
          %719 = sbr.rel (%p717) target = $region52
        $region51: #{tpu_custom_call.1} parent=39 // pred_region
          _
        $region52: #{tpu_custom_call.1} parent=39 // pred_fallthru
          _
      $region40: #{tpu_custom_call.1} parent=5 // pred_fallthru
        _
      %p720 = scmp.le.s32.totalorder 2, %s16
      // Predicated region
      $region53: #{tpu_custom_call.1} parent=5 // pred_check
        %p721 = pneg %p720
      $region54: #{tpu_custom_call.1} parent=5 // pred_check_branch
        %723 = sbr.rel (%p721) target = $region56
      $region55: #{tpu_custom_call.1} parent=5 // pred_region
        %s724 = ssub.s32 %s16, 2
        // Predicated region
        $region57: #{tpu_custom_call.1} parent=55 // pred_check
          %p725 = pneg %p171
        $region58: #{tpu_custom_call.1} parent=55 // pred_check_branch
          %727 = sbr.rel (%p725) target = $region60
        $region59: #{tpu_custom_call.1} parent=55 // pred_region
          %s728 = sand.u32 %s156, 1
          %s729 = scalar_lea.sflag [#allocation3], %s728
          %s730 = sand.u32 %s156, 1
          %s731 = smul.addr %s730, 16
          %s732 = scalar_lea.vmem [#allocation2], %s731
          %734 = dma.done %s729, 256
        $region60: #{tpu_custom_call.1} parent=55 // pred_fallthru
          _
        // Predicated region
        $region61: #{tpu_custom_call.1} parent=55 // pred_check
          %p735 = pneg %p197
        $region62: #{tpu_custom_call.1} parent=55 // pred_check_branch
          %737 = sbr.rel (%p735) target = $region64
        $region63: #{tpu_custom_call.1} parent=55 // pred_region
          %p738 = scmp.lt.s32.totalorder %s27, 1
          %s739 = scalar_select %p738, %s27, 1
          %s740 = smul.addr %s739, 4
          %s741 = smul.addr %s740, 8
          %s742 = scalar_lea.vmem %s6, %s741
        $region64: #{tpu_custom_call.1} parent=55 // pred_fallthru
          _
      $region56: #{tpu_custom_call.1} parent=5 // pred_fallthru
        _
    $region6: #{tpu_custom_call.1} parent=1 // loop_footer
      %s20 = sadd.s32 1, %s16
    $region7: #{tpu_custom_call.1} parent=1 // loop_footer_branch
      %15 = sbr.rel target = $region3
    $region8: #{tpu_custom_call.1} parent=1 // loop_exit
      _
    %743 = vsyncpa [#allocation3], 1
    %s744 = scalar_lea.sflag [#allocation3], 1
    %745 = vsyncpa %s744, 1

</llo_original>
